<compile_context>
chip_gen: v7x
topology: tpu7x:2x2x1
jax: 0.10.0
libtpu: 0.0.40
codegen_flags: <defaults>
</compile_context>

<pallas_src>
import math

import numpy as np
import jax
import jax.numpy as jnp
from jax.experimental import pallas as pl
from jax.experimental.pallas import tpu as pltpu

SELU_ALPHA = 1.6732632423543772
SELU_LAMBDA = 1.0507009873554805
BN_EPS = 1e-5
_ROW_ALIGN = 16  # sublane alignment that is safe for bf16 (16, 128) tiled blocks


def _band_matrices(w, W_in, W_out, pad_w):
    """w: (Cout, Cin, KH, KW) torch-layout conv weight.

    Returns numpy M of shape (KH, W_in*Cin, W_out*Cout) such that, per height
    tap kh,
      out[h, wo*Cout + co] += sum_{wi,ci} x[h+kh, wi*Cin+ci] * M[kh, wi*Cin+ci, wo*Cout+co]
    reproduces a stride-1 cross-correlation with zero width-padding `pad_w`.
    """
    w = np.asarray(w, dtype=np.float32)
    Cout, Cin, KH, KW = w.shape
    M = np.zeros((KH, W_in * Cin, W_out * Cout), dtype=np.float32)
    for kh in range(KH):
        for wo in range(W_out):
            for wi in range(W_in):
                kw = wi + pad_w - wo
                if 0 <= kw < KW:
                    M[kh, wi * Cin:(wi + 1) * Cin,
                      wo * Cout:(wo + 1) * Cout] = w[:, :, kh, kw].T
    return M


def _shift_rows_up(a):
    """out[r] = a[r+1] (wrap).  The wrapped row only lands on per-sample padding
    rows that are never read back as a valid output row."""
    return jnp.concatenate([a[1:, :], a[:1, :]], axis=0)


def _make_kernel(Cout, WC, downsample):
    def kernel(x_ref, m1_ref, b1_ref, m2_ref, b2_ref, o_ref):
        x = x_ref[...]                                    # (R, W*Cin) bf16
        xs = _shift_rows_up(x)                            # next height tap / identity rows

        # ---- conv1 (+ folded bn2): both height taps in ONE MXU matmul ----
        xcat = jnp.concatenate([x, xs], axis=1)           # (R, 2*W*Cin)
        h1 = jnp.dot(xcat, m1_ref[...], preferred_element_type=jnp.float32)
        h1 = h1 + b1_ref[...]                             # bias1 already includes bn2 fold
        # ---- SELU (exp runs on the EUP slot) ----
        h1 = SELU_LAMBDA * jnp.where(h1 > 0, h1, SELU_ALPHA * (jnp.exp(h1) - 1.0))

        h1b = h1.astype(jnp.bfloat16)
        h1sb = _shift_rows_up(h1b)

        # ---- conv2 (+ downsample conv) as ONE matmul via K-concat ----
        parts = [h1b, h1sb] + ([xs] if downsample else [])
        res = jnp.dot(jnp.concatenate(parts, axis=1), m2_ref[...],
                      preferred_element_type=jnp.float32)
        res = res + b2_ref[...]
        if not downsample:
            res = res + xs.astype(jnp.float32)            # identity path (Cin == Cout)

        # ---- MaxPool2d((1,3)): centered 3-wide sliding max via two XLU lane
        #      rotations; wrapper picks width offsets 1, 4, 7, ... (the window
        #      centers), so this is independent of the rotate direction. ----
        left = pltpu.roll(res, shift=Cout, axis=1)
        right = pltpu.roll(res, shift=WC - Cout, axis=1)
        o_ref[...] = jnp.maximum(jnp.maximum(res, left), right).astype(o_ref.dtype)

    return kernel


def _choose_packing(N, H, target_rows=512):
    """Pick (rows-per-sample Hs, samples-per-step Nb, padded batch N_pad)."""
    h2 = H + 2
    nb0 = _ROW_ALIGN // math.gcd(h2, _ROW_ALIGN)      # min samples/step at tight packing
    if N >= 2 * nb0:
        Hs = h2                                       # tight: zero per-sample row waste
    else:
        # few samples: pad each sample's rows so one sample per step is aligned,
        # keeping >= 2 grid steps (both v7x TensorCores busy on the parallel axis)
        Hs = -(-h2 // _ROW_ALIGN) * _ROW_ALIGN
        nb0 = 1
    groups = -(-N // nb0)
    per_step_cap = max(1, groups // 2) if groups >= 2 else 1   # keep >= 2 grid steps
    g = max(1, min(target_rows // (Hs * nb0), per_step_cap))
    Nb = g * nb0
    N_pad = -(-N // Nb) * Nb
    return Hs, Nb, N_pad


def residual_block_forward(x, params, *, first=False):
    """x: (N, Cin, H, W) float32 NCHW.  Returns (N, Cout, H, W//3) float32 NCHW."""
    del first  # the bn1/selu branch result is discarded by the reference forward
    N, Cin, H, W = x.shape
    Cout = params["conv1_w"].shape[0]
    downsample = Cin != Cout
    Wmp = W // 3
    WC = W * Cout
    assert W >= 3 and Wmp >= 1, "MaxPool2d((1,3)) needs W >= 3"

    Hs, Nb, N_pad = _choose_packing(N, H)
    R = Nb * Hs
    assert Hs >= H + 2 and R % _ROW_ALIGN == 0 and N_pad % Nb == 0

    # ---- layout glue: NCHW -> channels-last stacked rows, bf16 ----
    # TODO(synk): when stacking several Residual_blocks, keep activations in this
    # stacked layout between blocks and only convert at model entry/exit.
    x_rows = jnp.transpose(x, (0, 2, 3, 1)).reshape(N, H, W * Cin)
    x_rows = jnp.pad(x_rows, ((0, N_pad - N), (1, Hs - H - 1), (0, 0)))
    x_stacked = x_rows.astype(jnp.bfloat16).reshape(N_pad * Hs, W * Cin)

    # ---- precompute (f32): banded weights, bn2 fold, K-concat, then bf16 cast ----
    g = np.asarray(params["bn2_gamma"], np.float32)
    bt = np.asarray(params["bn2_beta"], np.float32)
    mu = np.asarray(params["bn2_mean"], np.float32)
    var = np.asarray(params["bn2_var"], np.float32)
    bscale = g / np.sqrt(var + BN_EPS)
    bshift = bt - mu * bscale

    m1 = _band_matrices(params["conv1_w"], W, W, pad_w=1)            # (2, W*Cin, WC)
    m1 = m1 * np.tile(bscale, W)[None, None, :]                      # fold bn2 scale
    m1cat = jnp.asarray(m1.reshape(2 * W * Cin, WC), dtype=jnp.bfloat16)
    b1 = np.asarray(params["conv1_b"], np.float32) * bscale + bshift  # fold bn2 shift
    b1row = jnp.asarray(np.tile(b1, W)[None, :], dtype=jnp.float32)

    m2 = _band_matrices(params["conv2_w"], W, W, pad_w=1).reshape(2 * WC, WC)
    b2 = np.asarray(params["conv2_b"], np.float32)
    if downsample:
        md = _band_matrices(params["convd_w"], W, W, pad_w=1).reshape(W * Cin, WC)
        m2 = np.concatenate([m2, md], axis=0)                        # conv2 + downsample
        b2 = b2 + np.asarray(params["convd_b"], np.float32)
    m2cat = jnp.asarray(m2, dtype=jnp.bfloat16)
    b2row = jnp.asarray(np.tile(b2, W)[None, :], dtype=jnp.float32)

    K1, K2 = m1cat.shape[0], m2cat.shape[0]

    # VMEM budget: double-buffered bf16 activation blocks + (effectively resident)
    # weight slabs + bias rows, with headroom.  TODO(synk): mark the constant
    # weight/bias specs pl.Buffered(1) to halve their footprint at large W.
    est = (2 * (R * W * Cin + R * WC) * 2          # in/out bf16 blocks, x2 buffers
           + 2 * (K1 + K2) * WC * 2                # bf16 weight slabs, x2 buffers
           + 4 * WC * 4)                           # bias rows
    vmem_limit = int(min(max(2 * est, 32 << 20), 96 << 20))

    grid_spec = pltpu.PrefetchScalarGridSpec(
        num_scalar_prefetch=0,
        grid=(N_pad // Nb,),
        in_specs=[
            pl.BlockSpec((R, W * Cin), lambda i: (i, 0)),
            pl.BlockSpec((K1, WC), lambda i: (0, 0)),
            pl.BlockSpec((1, WC), lambda i: (0, 0)),
            pl.BlockSpec((K2, WC), lambda i: (0, 0)),
            pl.BlockSpec((1, WC), lambda i: (0, 0)),
        ],
        out_specs=pl.BlockSpec((R, WC), lambda i: (i, 0)),
    )
    out_full = pl.pallas_call(
        _make_kernel(Cout, WC, downsample),
        grid_spec=grid_spec,
        out_shape=jax.ShapeDtypeStruct((N_pad * Hs, WC), jnp.bfloat16),
        compiler_params=pltpu.CompilerParams(
            dimension_semantics=("parallel",),        # batch axis: megacore-shardable
            vmem_limit_bytes=vmem_limit),
    )(x_stacked, m1cat, b1row, m2cat, b2row)

    # ---- layout glue back: select the 3-wide window centers (widths 1,4,7,...),
    #      drop row/batch padding, cast to f32, back to NCHW.
    # TODO(synk): when Wmp*Cout is a multiple of 128, do this stride-3 subsample
    # in-kernel and store only (R, Wmp*Cout) to cut output HBM traffic 3x. ----
    out_full = out_full.reshape(N_pad, Hs, W, Cout)
    out = out_full[:N, :H, 1:3 * Wmp:3, :].astype(jnp.float32)   # (N, H, Wmp, Cout)
    return jnp.transpose(out, (0, 3, 1, 2))                      # (N, Cout, H, Wmp)


def init_params(key, nb_filts):
    cin, cout = nb_filts
    ks = jax.random.split(key, 10)
    p = {
        "conv1_w": 0.1 * jax.random.normal(ks[0], (cout, cin, 2, 3), jnp.float32),
        "conv1_b": 0.1 * jax.random.normal(ks[1], (cout,), jnp.float32),
        "conv2_w": 0.1 * jax.random.normal(ks[2], (cout, cout, 2, 3), jnp.float32),
        "conv2_b": 0.1 * jax.random.normal(ks[3], (cout,), jnp.float32),
        "bn2_gamma": 1.0 + 0.1 * jax.random.normal(ks[4], (cout,), jnp.float32),
        "bn2_beta": 0.1 * jax.random.normal(ks[5], (cout,), jnp.float32),
        "bn2_mean": 0.1 * jax.random.normal(ks[6], (cout,), jnp.float32),
        "bn2_var": 1.0 + 0.2 * jax.random.uniform(ks[7], (cout,), jnp.float32),
    }
    if cin != cout:
        p["convd_w"] = 0.1 * jax.random.normal(ks[8], (cout, cin, 1, 3), jnp.float32)
        p["convd_b"] = 0.1 * jax.random.normal(ks[9], (cout,), jnp.float32)
    return p


def reference_forward(x, params):
    """Pure-JAX reference mirroring the PyTorch forward (inference-mode BN)."""
    def conv(v, w, b, pad):
        out = jax.lax.conv_general_dilated(
            v, w, window_strides=(1, 1),
            padding=((pad[0], pad[0]), (pad[1], pad[1])),
            dimension_numbers=("NCHW", "OIHW", "NCHW"))
        return out + b[None, :, None, None]

    def bn(v, g, b, m, var):
        s = g / jnp.sqrt(var + BN_EPS)
        return (v - m[None, :, None, None]) * s[None, :, None, None] + b[None, :, None, None]

    out = conv(x, params["conv1_w"], params["conv1_b"], (1, 1))
    out = bn(out, params["bn2_gamma"], params["bn2_beta"],
             params["bn2_mean"], params["bn2_var"])
    out = jax.nn.selu(out)
    out = conv(out, params["conv2_w"], params["conv2_b"], (0, 1))
    ident = (conv(x, params["convd_w"], params["convd_b"], (0, 1))
             if "convd_w" in params else x)
    out = out + ident
    N, C, H, W = out.shape
    Wmp = W // 3
    return out[:, :, :, :Wmp * 3].reshape(N, C, H, Wmp, 3).max(axis=-1)


if __name__ == "__main__":
    key = jax.random.PRNGKey(0)
    N, H, W = 2, 16, 16
    for nb_filts in ([4, 8], [8, 8]):   # downsample and identity-passthrough paths
        kx, kp, key = jax.random.split(key, 3)
        x = jax.random.normal(kx, (N, nb_filts[0], H, W), jnp.float32)
        params = init_params(kp, nb_filts)

        out = jax.block_until_ready(residual_block_forward(x, params, first=False))
        ref = jax.block_until_ready(reference_forward(x, params))

        assert out.shape == ref.shape == (N, nb_filts[1], H, W // 3), out.shape
        np.testing.assert_allclose(np.asarray(out), np.asarray(ref),
                                   rtol=2e-2, atol=2e-2)
    print("KERNEL_OK")
</pallas_src>

<mosaic_0001>
module attributes {stable_mosaic.version = 11 : i64} {
  func.func @kernel(%arg0: i32, %arg1: memref<32x64xbf16, #tpu.memory_space<vmem>>, %arg2: memref<128x128xbf16, #tpu.memory_space<vmem>>, %arg3: memref<1x128xf32, #tpu.memory_space<vmem>>, %arg4: memref<320x128xbf16, #tpu.memory_space<vmem>>, %arg5: memref<1x128xf32, #tpu.memory_space<vmem>>, %arg6: memref<32x128xbf16, #tpu.memory_space<vmem>>) attributes {dimension_semantics = [#tpu.dimension_semantics<parallel>], iteration_bounds = array<i64: 2>, scalar_prefetch = 0 : i64, scratch_operands = 0 : i64, tpu.core_type = #tpu.core_type<tc>, window_params = [{transform_indices = @transform_0, window_bounds = array<i64: 32, 64>}, {pipeline_mode = #tpu.pipeline_mode<synchronous>, transform_indices = @transform_1, window_bounds = array<i64: 128, 128>}, {pipeline_mode = #tpu.pipeline_mode<synchronous>, transform_indices = @transform_2, window_bounds = array<i64: 1, 128>}, {pipeline_mode = #tpu.pipeline_mode<synchronous>, transform_indices = @transform_3, window_bounds = array<i64: 320, 128>}, {pipeline_mode = #tpu.pipeline_mode<synchronous>, transform_indices = @transform_4, window_bounds = array<i64: 1, 128>}, {transform_indices = @transform_5, window_bounds = array<i64: 32, 128>}]} {
    %c0 = arith.constant 0 : index
    %c0_0 = arith.constant 0 : index
    %0 = vector.load %arg1[%c0, %c0_0] : memref<32x64xbf16, #tpu.memory_space<vmem>>, vector<32x64xbf16>
    %1 = vector.extract_strided_slice %0 {offsets = [1, 0], sizes = [31, 64], strides = [1, 1]} : vector<32x64xbf16> to vector<31x64xbf16>
    %2 = vector.extract_strided_slice %0 {offsets = [0, 0], sizes = [1, 64], strides = [1, 1]} : vector<32x64xbf16> to vector<1x64xbf16>
    %3 = tpu.concatenate %1, %2 in 0 : vector<31x64xbf16>, vector<1x64xbf16> -> vector<32x64xbf16>
    %4 = tpu.concatenate %0, %3 in 1 : vector<32x64xbf16>, vector<32x64xbf16> -> vector<32x128xbf16>
    %c0_1 = arith.constant 0 : index
    %c0_2 = arith.constant 0 : index
    %5 = vector.load %arg2[%c0_1, %c0_2] : memref<128x128xbf16, #tpu.memory_space<vmem>>, vector<128x128xbf16>
    %cst = arith.constant dense<0.000000e+00> : vector<32x128xf32>
    %6 = tpu.matmul %4, %5, %cst {dimension_numbers = #tpu.dot_dimension_numbers<[1], [0], [0], [1], [0, 0, 1, 1], [], []>} : vector<32x128xbf16>, vector<128x128xbf16>, vector<32x128xf32> -> vector<32x128xf32>
    %c0_3 = arith.constant 0 : index
    %c0_4 = arith.constant 0 : index
    %7 = vector.load %arg3[%c0_3, %c0_4] : memref<1x128xf32, #tpu.memory_space<vmem>>, vector<1x128xf32>
    %8 = vector.broadcast %7 : vector<1x128xf32> to vector<32x128xf32>
    %9 = arith.addf %6, %8 : vector<32x128xf32>
    %cst_5 = arith.constant 0.000000e+00 : f32
    %10 = vector.broadcast %cst_5 : f32 to vector<32x128xf32>
    %11 = arith.cmpf ogt, %9, %10 : vector<32x128xf32>
    %12 = math.exp %9 : vector<32x128xf32>
    %cst_6 = arith.constant 1.000000e+00 : f32
    %13 = vector.broadcast %cst_6 : f32 to vector<32x128xf32>
    %14 = arith.subf %12, %13 : vector<32x128xf32>
    %cst_7 = arith.constant 1.67326319 : f32
    %15 = vector.broadcast %cst_7 : f32 to vector<32x128xf32>
    %16 = arith.mulf %15, %14 : vector<32x128xf32>
    %17 = arith.select %11, %9, %16 : vector<32x128xi1>, vector<32x128xf32>
    %cst_8 = arith.constant 1.05070102 : f32
    %18 = vector.broadcast %cst_8 : f32 to vector<32x128xf32>
    %19 = arith.mulf %18, %17 : vector<32x128xf32>
    %20 = arith.truncf %19 : vector<32x128xf32> to vector<32x128xbf16>
    %21 = vector.extract_strided_slice %20 {offsets = [1, 0], sizes = [31, 128], strides = [1, 1]} : vector<32x128xbf16> to vector<31x128xbf16>
    %22 = vector.extract_strided_slice %20 {offsets = [0, 0], sizes = [1, 128], strides = [1, 1]} : vector<32x128xbf16> to vector<1x128xbf16>
    %23 = tpu.concatenate %21, %22 in 0 : vector<31x128xbf16>, vector<1x128xbf16> -> vector<32x128xbf16>
    %24 = tpu.concatenate %20, %23, %3 in 1 : vector<32x128xbf16>, vector<32x128xbf16>, vector<32x64xbf16> -> vector<32x320xbf16>
    %c0_9 = arith.constant 0 : index
    %c0_10 = arith.constant 0 : index
    %25 = vector.load %arg4[%c0_9, %c0_10] : memref<320x128xbf16, #tpu.memory_space<vmem>>, vector<320x128xbf16>
    %cst_11 = arith.constant dense<0.000000e+00> : vector<32x128xf32>
    %26 = tpu.matmul %24, %25, %cst_11 {dimension_numbers = #tpu.dot_dimension_numbers<[1], [0], [0], [1], [0, 0, 1, 1], [], []>} : vector<32x320xbf16>, vector<320x128xbf16>, vector<32x128xf32> -> vector<32x128xf32>
    %c0_12 = arith.constant 0 : index
    %c0_13 = arith.constant 0 : index
    %27 = vector.load %arg5[%c0_12, %c0_13] : memref<1x128xf32, #tpu.memory_space<vmem>>, vector<1x128xf32>
    %28 = vector.broadcast %27 : vector<1x128xf32> to vector<32x128xf32>
    %29 = arith.addf %26, %28 : vector<32x128xf32>
    %c8_i32 = arith.constant 8 : i32
    %30 = tpu.dynamic_rotate %29 by %c8_i32 dim 1 : vector<32x128xf32>, i32 -> vector<32x128xf32>
    %c120_i32 = arith.constant 120 : i32
    %31 = tpu.dynamic_rotate %29 by %c120_i32 dim 1 : vector<32x128xf32>, i32 -> vector<32x128xf32>
    %32 = arith.maximumf %29, %30 : vector<32x128xf32>
    %33 = arith.maximumf %32, %31 : vector<32x128xf32>
    %34 = arith.truncf %33 : vector<32x128xf32> to vector<32x128xbf16>
    %c0_14 = arith.constant 0 : index
    %c0_15 = arith.constant 0 : index
    %35 = vector.load %arg6[%c0_14, %c0_15] : memref<32x128xbf16, #tpu.memory_space<vmem>>, vector<32x128xbf16>
    tpu.vector_store %arg6[%c0_14, %c0_15], %34 {strides = array<i32>} : memref<32x128xbf16, #tpu.memory_space<vmem>>, vector<32x128xbf16>,
    return
  }
  func.func @transform_0(%arg0: i32) -> (i32, i32) {
    %c0_i32 = arith.constant 0 : i32
    %c0_i32_0 = arith.constant 0 : i32
    return %arg0, %c0_i32 : i32, i32
  }
  func.func @transform_1(%arg0: i32) -> (i32, i32) {
    %c0_i32 = arith.constant 0 : i32
    %c0_i32_0 = arith.constant 0 : i32
    %c0_i32_1 = arith.constant 0 : i32
    return %c0_i32, %c0_i32_0 : i32, i32
  }
  func.func @transform_2(%arg0: i32) -> (i32, i32) {
    %c0_i32 = arith.constant 0 : i32
    %c0_i32_0 = arith.constant 0 : i32
    %c0_i32_1 = arith.constant 0 : i32
    return %c0_i32, %c0_i32_0 : i32, i32
  }
  func.func @transform_3(%arg0: i32) -> (i32, i32) {
    %c0_i32 = arith.constant 0 : i32
    %c0_i32_0 = arith.constant 0 : i32
    %c0_i32_1 = arith.constant 0 : i32
    return %c0_i32, %c0_i32_0 : i32, i32
  }
  func.func @transform_4(%arg0: i32) -> (i32, i32) {
    %c0_i32 = arith.constant 0 : i32
    %c0_i32_0 = arith.constant 0 : i32
    %c0_i32_1 = arith.constant 0 : i32
    return %c0_i32, %c0_i32_0 : i32, i32
  }
  func.func @transform_5(%arg0: i32) -> (i32, i32) {
    %c0_i32 = arith.constant 0 : i32
    %c0_i32_0 = arith.constant 0 : i32
    return %arg0, %c0_i32 : i32, i32
  }
}

</mosaic_0001>

<llo_original>
// kernel: tpu_custom_call.1
$region0: #{tpu_custom_call.1}
  #allocation0 [shape = 'u32[]', space=smem, size = 0x4, offset = 0x4, fixed_abs, tag = 'smem constant byte address 0x4 - core index']
  #allocation1 [shape = 'u32[144,128]{1,0:T(1,128)}', space=vmem, size = 0x12000, scoped, tag = 'internal scratch']
  %s0 = inlined_call_operand.hbm [shape: bf16[64,64], index: 0, kind: input, shape index: {}]
  %s1 = inlined_call_operand.hbm [shape: bf16[128,128], index: 1, kind: input, shape index: {}]
  %s2 = inlined_call_operand.vmem [shape: f32[1,128], index: 2, kind: input, shape index: {}]
  %s3 = inlined_call_operand.hbm [shape: bf16[320,128], index: 3, kind: input, shape index: {}]
  %s4 = inlined_call_operand.vmem [shape: f32[1,128], index: 4, kind: input, shape index: {}]
  %s5 = inlined_call_operand.hbm [shape: bf16[64,128], index: 5, kind: output, shape index: {}]
  %s6 = sld [smem:[#allocation0]]
  $region65: #{tpu_custom_call.1} parent=0
    _
  %s8 = ssub.s32 1, %s6
  %s9 = scalar_select 0, %s8, %s6
  $region1: #{tpu_custom_call.1} parent=0
    #allocation2 [shape = 'u8[16384]{0}', space=vmem, size = 0x4000, scoped, tag = 'input window, operand 0']
    #allocation3 [shape = 's32[2]{0}', space=sflag, size = 0x8, scoped, tag = 'scoped memory for tpu_custom_call.1']
    #allocation4 [shape = 's32[2]{0}', space=sflag, size = 0x8, scoped, tag = 'scoped memory for tpu_custom_call.1']
    #allocation5 [shape = 'u8[32768]{0}', space=vmem, size = 0x8000, scoped, tag = 'input window, operand 1, single buffered']
    #allocation6 [shape = 's32[1]{0}', space=sflag, size = 0x4, scoped, tag = 'scoped memory for tpu_custom_call.1']
    #allocation7 [shape = 'u8[81920]{0}', space=vmem, size = 0x14000, scoped, tag = 'input window, operand 3, single buffered']
    #allocation8 [shape = 'u8[16384]{0}', space=vmem, size = 0x4000, scoped, tag = 'output window, operand 0']
    %10 = vsyncpa [#allocation3], 0
    %s11 = scalar_lea.sflag [#allocation3], 1
    %12 = vsyncpa %s11, 0
    %13 = vsyncpa [#allocation6], 0
    %14 = vsyncpa [#allocation4], 0
    %s15 = scalar_lea.sflag [#allocation4], 1
    %16 = vsyncpa %s15, 0
    loop: start=0, step=1, limit=4
    $region2: #{tpu_custom_call.1} parent=1 // loop_pre_header
      _
    $region3: #{tpu_custom_call.1} parent=1 // loop_header
      %s18 = sphi 0, %s22
      %p19 = scmp.ge.s32.totalorder %s18, 4
      %s28 = sphi 0, %s30
      %s31 = sphi 0, %s28
      %s32 = sphi 0, %s31
      %s48 = sphi 0, %s32
      %s52 = sphi 0, %s52
      %s54 = sphi 0, %s52
      %s55 = sphi 0, %s54
      %s69 = sphi 0, %s55
      %s73 = sphi 0, %s73
      %s75 = sphi 0, %s73
      %s76 = sphi 0, %s75
      %s90 = sphi 0, %s76
      %s94 = sphi 0, %s94
      %s96 = sphi 0, %s94
      %s97 = sphi 0, %s96
      %s111 = sphi 0, %s97
      %s115 = sphi 0, %s115
      %s117 = sphi 0, %s115
      %s118 = sphi 0, %s117
      %s132 = sphi 0, %s118
      %s138 = sphi 0, %s140
      %s141 = sphi 0, %s138
      %s142 = sphi 0, %s141
      %s158 = sphi 0, %s142
    $region4: #{tpu_custom_call.1} parent=1 // loop_header_branch
      %21 = sbr.rel (%p19) target = $region8
    $region5: #{tpu_custom_call.1} parent=1 // loop_body
      %s23 = ssub.s32 %s18, 1
      %s24 = ssub.s32 %s18, 2
      %s25 = sadd.s32 %s18, 1
      %s26 = ssub.s32 %s18, %s25
      %p27 = scmp.eq.s32.totalorder %s26, 0
      %s29 = sadd.s32 %s28, 1
      %s30 = scalar_select %p27, %s28, %s29
      %p33 = pneg %p27
      %p34 = scmp.eq.s32.totalorder %s18, 1
      %p35 = por %p33, %p34
      %p36 = scmp.ne.s32.totalorder %s28, %s31
      %p37 = scmp.eq.s32.totalorder %s18, 0
      %p38 = por %p36, %p37
      %p39 = scmp.ne.s32.totalorder %s28, %s31
      %p40 = scmp.eq.s32.totalorder %s23, 1
      %p41 = por %p39, %p40
      %p42 = scmp.ne.s32.totalorder %s31, %s32
      %p43 = scmp.eq.s32.totalorder %s23, 0
      %p44 = por %p42, %p43
      %p45 = scmp.ne.s32.totalorder %s31, %s32
      %p46 = scmp.eq.s32.totalorder %s24, 1
      %p47 = por %p45, %p46
      %p49 = scmp.ne.s32.totalorder %s32, %s48
      %p50 = scmp.eq.s32.totalorder %s24, 0
      %p51 = por %p49, %p50
      %s53 = sadd.s32 %s52, 1
      %p56 = scmp.eq.s32.totalorder %s18, 1
      %p57 = scmp.ne.s32.totalorder %s52, %s54
      %p58 = scmp.eq.s32.totalorder %s18, 0
      %p59 = por %p57, %p58
      %p60 = scmp.ne.s32.totalorder %s52, %s54
      %p61 = scmp.eq.s32.totalorder %s23, 1
      %p62 = por %p60, %p61
      %p63 = scmp.ne.s32.totalorder %s54, %s55
      %p64 = scmp.eq.s32.totalorder %s23, 0
      %p65 = por %p63, %p64
      %p66 = scmp.ne.s32.totalorder %s54, %s55
      %p67 = scmp.eq.s32.totalorder %s24, 1
      %p68 = por %p66, %p67
      %p70 = scmp.ne.s32.totalorder %s55, %s69
      %p71 = scmp.eq.s32.totalorder %s24, 0
      %p72 = por %p70, %p71
      %s74 = sadd.s32 %s73, 1
      %p77 = scmp.eq.s32.totalorder %s18, 1
      %p78 = scmp.ne.s32.totalorder %s73, %s75
      %p79 = scmp.eq.s32.totalorder %s18, 0
      %p80 = por %p78, %p79
      %p81 = scmp.ne.s32.totalorder %s73, %s75
      %p82 = scmp.eq.s32.totalorder %s23, 1
      %p83 = por %p81, %p82
      %p84 = scmp.ne.s32.totalorder %s75, %s76
      %p85 = scmp.eq.s32.totalorder %s23, 0
      %p86 = por %p84, %p85
      %p87 = scmp.ne.s32.totalorder %s75, %s76
      %p88 = scmp.eq.s32.totalorder %s24, 1
      %p89 = por %p87, %p88
      %p91 = scmp.ne.s32.totalorder %s76, %s90
      %p92 = scmp.eq.s32.totalorder %s24, 0
      %p93 = por %p91, %p92
      %s95 = sadd.s32 %s94, 1
      %p98 = scmp.eq.s32.totalorder %s18, 1
      %p99 = scmp.ne.s32.totalorder %s94, %s96
      %p100 = scmp.eq.s32.totalorder %s18, 0
      %p101 = por %p99, %p100
      %p102 = scmp.ne.s32.totalorder %s94, %s96
      %p103 = scmp.eq.s32.totalorder %s23, 1
      %p104 = por %p102, %p103
      %p105 = scmp.ne.s32.totalorder %s96, %s97
      %p106 = scmp.eq.s32.totalorder %s23, 0
      %p107 = por %p105, %p106
      %p108 = scmp.ne.s32.totalorder %s96, %s97
      %p109 = scmp.eq.s32.totalorder %s24, 1
      %p110 = por %p108, %p109
      %p112 = scmp.ne.s32.totalorder %s97, %s111
      %p113 = scmp.eq.s32.totalorder %s24, 0
      %p114 = por %p112, %p113
      %s116 = sadd.s32 %s115, 1
      %p119 = scmp.eq.s32.totalorder %s18, 1
      %p120 = scmp.ne.s32.totalorder %s115, %s117
      %p121 = scmp.eq.s32.totalorder %s18, 0
      %p122 = por %p120, %p121
      %p123 = scmp.ne.s32.totalorder %s115, %s117
      %p124 = scmp.eq.s32.totalorder %s23, 1
      %p125 = por %p123, %p124
      %p126 = scmp.ne.s32.totalorder %s117, %s118
      %p127 = scmp.eq.s32.totalorder %s23, 0
      %p128 = por %p126, %p127
      %p129 = scmp.ne.s32.totalorder %s117, %s118
      %p130 = scmp.eq.s32.totalorder %s24, 1
      %p131 = por %p129, %p130
      %p133 = scmp.ne.s32.totalorder %s118, %s132
      %p134 = scmp.eq.s32.totalorder %s24, 0
      %p135 = por %p133, %p134
      %s136 = ssub.s32 %s18, %s25
      %p137 = scmp.eq.s32.totalorder %s136, 0
      %s139 = sadd.s32 %s138, 1
      %s140 = scalar_select %p137, %s138, %s139
      %p143 = pneg %p137
      %p144 = scmp.eq.s32.totalorder %s18, 1
      %p145 = por %p143, %p144
      %p146 = scmp.ne.s32.totalorder %s138, %s141
      %p147 = scmp.eq.s32.totalorder %s18, 0
      %p148 = por %p146, %p147
      %p149 = scmp.ne.s32.totalorder %s138, %s141
      %p150 = scmp.eq.s32.totalorder %s23, 1
      %p151 = por %p149, %p150
      %p152 = scmp.ne.s32.totalorder %s141, %s142
      %p153 = scmp.eq.s32.totalorder %s23, 0
      %p154 = por %p152, %p153
      %p155 = scmp.ne.s32.totalorder %s141, %s142
      %p156 = scmp.eq.s32.totalorder %s24, 1
      %p157 = por %p155, %p156
      %p159 = scmp.ne.s32.totalorder %s142, %s158
      %p160 = scmp.eq.s32.totalorder %s24, 0
      %p161 = por %p159, %p160
      %p162 = scmp.le.s32.totalorder 1, %s18
      %p163 = scmp.lt.s32.totalorder %s18, 3
      %p164 = pnand %p162, %p163
      %p165 = pneg %p164
      // Predicated region
      $region9: #{tpu_custom_call.1} parent=5 // pred_check
        _
      $region10: #{tpu_custom_call.1} parent=5 // pred_check_branch
        %167 = sbr.rel (%p164) target = $region12
      $region11: #{tpu_custom_call.1} parent=5 // pred_region
        %s168 = ssub.s32 %s18, 1
        // Predicated region
        $region13: #{tpu_custom_call.1} parent=11 // pred_check
          %p169 = pneg %p65
        $region14: #{tpu_custom_call.1} parent=11 // pred_check_branch
          %171 = sbr.rel (%p169) target = $region16
        $region15: #{tpu_custom_call.1} parent=11 // pred_region
          %s173 = ssub.s32 1024, 1024
          %174 = vsyncadd [#allocation6], %s173
          %s175 = sshll.u32 [#allocation5], 4
          %s176 = int_to_ptr.vmem [resolvable:$true] %s175
          %181 = dma.hbm_to_vmem [thread:$0]  %s1, 1024, %s176, [#allocation6], 64, 64, 4
        $region16: #{tpu_custom_call.1} parent=11 // pred_fallthru
          _
        // Predicated region
        $region17: #{tpu_custom_call.1} parent=11 // pred_check
          %p182 = pneg %p86
        $region18: #{tpu_custom_call.1} parent=11 // pred_check_branch
          %184 = sbr.rel (%p182) target = $region20
        $region19: #{tpu_custom_call.1} parent=11 // pred_region
          _
        $region20: #{tpu_custom_call.1} parent=11 // pred_fallthru
          _
        // Predicated region
        $region21: #{tpu_custom_call.1} parent=11 // pred_check
          %p185 = pneg %p107
        $region22: #{tpu_custom_call.1} parent=11 // pred_check_branch
          %187 = sbr.rel (%p185) target = $region24
        $region23: #{tpu_custom_call.1} parent=11 // pred_region
          %s189 = ssub.s32 2560, 2560
          %190 = vsyncadd [#allocation6], %s189
          %s191 = sshll.u32 [#allocation7], 4
          %s192 = int_to_ptr.vmem [resolvable:$true] %s191
          %197 = dma.hbm_to_vmem [thread:$0]  %s3, 2560, %s192, [#allocation6], 64, 64, 4
        $region24: #{tpu_custom_call.1} parent=11 // pred_fallthru
          _
        // Predicated region
        $region25: #{tpu_custom_call.1} parent=11 // pred_check
          %p198 = pneg %p128
        $region26: #{tpu_custom_call.1} parent=11 // pred_check_branch
          %200 = sbr.rel (%p198) target = $region28
        $region27: #{tpu_custom_call.1} parent=11 // pred_region
          _
        $region28: #{tpu_custom_call.1} parent=11 // pred_fallthru
          _
      $region12: #{tpu_custom_call.1} parent=5 // pred_fallthru
        _
      %p201 = scmp.lt.s32.totalorder %s18, 2
      // Predicated region
      $region29: #{tpu_custom_call.1} parent=5 // pred_check
        %p202 = pneg %p201
      $region30: #{tpu_custom_call.1} parent=5 // pred_check_branch
        %204 = sbr.rel (%p202) target = $region32
      $region31: #{tpu_custom_call.1} parent=5 // pred_region
        // Predicated region
        $region33: #{tpu_custom_call.1} parent=31 // pred_check
          %p205 = pneg %p38
        $region34: #{tpu_custom_call.1} parent=31 // pred_check_branch
          %207 = sbr.rel (%p205) target = $region36
        $region35: #{tpu_custom_call.1} parent=31 // pred_region
          %s208 = sand.u32 %s28, 1
          %s209 = scalar_lea.sflag [#allocation3], %s208
          %s210 = sand.u32 %s28, 1
          %s211 = smul.addr %s210, 16
          %s212 = scalar_lea.vmem [#allocation2], %s211
          %s213 = smul.u32 4, %s18
          %s215 = ssub.s32 256, 256
          %216 = vsyncadd %s209, %s215
          %s217 = smul.addr %s213, 64
          %s218 = scalar_lea.hbm %s0, %s217
          %s219 = sshll.u32 %s212, 4
          %s220 = int_to_ptr.vmem [resolvable:$true] %s219
          %225 = dma.hbm_to_vmem [thread:$0]  %s218, 256, %s220, %s209, 64, 64, 4
        $region36: #{tpu_custom_call.1} parent=31 // pred_fallthru
          _
      $region32: #{tpu_custom_call.1} parent=5 // pred_fallthru
        _
      %p226 = scmp.le.s32.totalorder 1, %s18
      %p227 = scmp.lt.s32.totalorder %s18, 3
      %p228 = pnand %p226, %p227
      %p229 = pneg %p228
      // Predicated region
      $region37: #{tpu_custom_call.1} parent=5 // pred_check
        _
      $region38: #{tpu_custom_call.1} parent=5 // pred_check_branch
        %231 = sbr.rel (%p228) target = $region40
      $region39: #{tpu_custom_call.1} parent=5 // pred_region
        %s232 = ssub.s32 %s18, 1
        %s233 = sand.u32 %s31, 1
        %s234 = scalar_lea.sflag [#allocation3], %s233
        %s235 = sand.u32 %s31, 1
        %s236 = smul.addr %s235, 16
        %s237 = scalar_lea.vmem [#allocation2], %s236
        // Predicated region
        $region41: #{tpu_custom_call.1} parent=39 // pred_check
          %p238 = pneg %p44
        $region42: #{tpu_custom_call.1} parent=39 // pred_check_branch
          %240 = sbr.rel (%p238) target = $region44
        $region43: #{tpu_custom_call.1} parent=39 // pred_region
          %241 = dma.done %s234, 256
        $region44: #{tpu_custom_call.1} parent=39 // pred_fallthru
          _
        // Predicated region
        $region45: #{tpu_custom_call.1} parent=39 // pred_check
          %p242 = pneg %p65
        $region46: #{tpu_custom_call.1} parent=39 // pred_check_branch
          %244 = sbr.rel (%p242) target = $region48
        $region47: #{tpu_custom_call.1} parent=39 // pred_region
          %245 = dma.done [#allocation6], 1024
        $region48: #{tpu_custom_call.1} parent=39 // pred_fallthru
          _
        // Predicated region
        $region49: #{tpu_custom_call.1} parent=39 // pred_check
          %p246 = pneg %p107
        $region50: #{tpu_custom_call.1} parent=39 // pred_check_branch
          %248 = sbr.rel (%p246) target = $region52
        $region51: #{tpu_custom_call.1} parent=39 // pred_region
          %249 = dma.done [#allocation6], 2560
        $region52: #{tpu_custom_call.1} parent=39 // pred_fallthru
          _
        %s250 = sand.u32 %s31, 1
        %s251 = scalar_lea.sflag [#allocation3], %s250
        %s252 = sand.u32 %s31, 1
        %s253 = smul.addr %s252, 16
        %s254 = scalar_lea.vmem [#allocation2], %s253
        %p255 = pneg %p44
        %p256 = pneg %p41
        %p257 = pneg %p65
        %p258 = pneg %p62
        %p259 = pneg %p86
        %p260 = pneg %p83
        %p261 = pneg %p107
        %p262 = pneg %p104
        %p263 = pneg %p128
        %p264 = pneg %p125
        %p265 = pneg %p154
        %p266 = pneg %p151
        %s267 = sand.u32 %s141, 1
        %s268 = scalar_lea.sflag [#allocation4], %s267
        %s269 = sand.u32 %s141, 1
        %s270 = smul.addr %s269, 16
        %s271 = scalar_lea.vmem [#allocation8], %s270
        %s272 = smul.u32 4, %s23
        %s273 = smul.u32 4, %s23
        %v275 = vld [vmem:[%s237] sm:$0xf]
        %v276 = vld [vmem:[%s237 + $0x4] sm:$0xf]
        %v277 = vld [vmem:[%s237 + $0x8] sm:$0xf]
        %v278 = vld [vmem:[%s237 + $0xc] sm:$0xf]
        %v283 = vunpack.c.l.b16 %v275
        %v284 = vunpack.c.l.b16 %v276
        %v285 = vunpack.c.l.b16 %v277
        %v286 = vunpack.c.l.b16 %v278
        %v287 = vpack.c.b16 %v284, %v283
        %v288 = vpack.c.b16 %v286, %v285
        %vm289 = vsmask.f32 7424
        %v291 = vshrl.u32 %v287, 16
        %v293 = vshll.u32 %v287, 16
        %v295 = vrot.slane %v293, 1
        %v296 = vor.u32 %v291, %v295
        %v298 = vshll.u32 %v288, 16
        %v300 = vrot.slane %v298, 1
        %v301 = vsel %vm289, %v296, %v300
        %v302 = vshrl.u32 %v288, 16
        %v304 = vor.u32 %v302, %v300
        %v306 = vpack.c.b16 %v283, %v283
        %v308 = vshll.u32 %v306, 16
        %v310 = vrot.slane %v308, 1
        %vm312 = vcmask 1047552
        %vm313 = vmand %vm312, %vm289
        %v314 = vsel %vm313, %v304, %v310
        %316 = vrot.lane.b32.xlu0 %v301, 64
        %v317 = vpop.permute.xlu0 %316
        %318 = vrot.lane.b32.xlu0 %v314, 64
        %v319 = vpop.permute.xlu0 %318
        %vm320 = vcmask 523264
        %v322 = vsel %vm320, %v287, %v317
        %v325 = vsel %vm320, %v288, %v319
        %v327 = vld [vmem:[#allocation5] sm:$0xf]
        %v328 = vld [vmem:[#allocation5 + $0x4] sm:$0xf]
        %v329 = vld [vmem:[#allocation5 + $0x8] sm:$0xf]
        %v330 = vld [vmem:[#allocation5 + $0xc] sm:$0xf]
        %v331 = vld [vmem:[#allocation5 + $0x10] sm:$0xf]
        %v332 = vld [vmem:[#allocation5 + $0x14] sm:$0xf]
        %v333 = vld [vmem:[#allocation5 + $0x18] sm:$0xf]
        %v334 = vld [vmem:[#allocation5 + $0x1c] sm:$0xf]
        %v335 = vld [vmem:[#allocation5 + $0x20] sm:$0xf]
        %v336 = vld [vmem:[#allocation5 + $0x24] sm:$0xf]
        %v337 = vld [vmem:[#allocation5 + $0x28] sm:$0xf]
        %v338 = vld [vmem:[#allocation5 + $0x2c] sm:$0xf]
        %v339 = vld [vmem:[#allocation5 + $0x30] sm:$0xf]
        %v340 = vld [vmem:[#allocation5 + $0x34] sm:$0xf]
        %v341 = vld [vmem:[#allocation5 + $0x38] sm:$0xf]
        %v342 = vld [vmem:[#allocation5 + $0x3c] sm:$0xf]
        %v343 = vld [vmem:[%s2] sm:$0x1]
        %v345 = vlaneseq
        %v346 = vshrl.u32 %v345, 7
        %v347 = vsub.s32 0, %v346
        %v348 = vrot.slane %v343, %v347
        %v366 = vunpack.c.l.b16 %v327
        %v367 = vunpack.c.l.b16 %v328
        %v368 = vunpack.c.l.b16 %v329
        %v369 = vunpack.c.l.b16 %v330
        %v370 = vunpack.c.l.b16 %v331
        %v371 = vunpack.c.l.b16 %v332
        %v372 = vunpack.c.l.b16 %v333
        %v373 = vunpack.c.l.b16 %v334
        %v374 = vunpack.c.l.b16 %v335
        %v375 = vunpack.c.l.b16 %v336
        %v376 = vunpack.c.l.b16 %v337
        %v377 = vunpack.c.l.b16 %v338
        %v378 = vunpack.c.l.b16 %v339
        %v379 = vunpack.c.l.b16 %v340
        %v380 = vunpack.c.l.b16 %v341
        %v381 = vunpack.c.l.b16 %v342
        %v382 = vpack.c.b16 %v367, %v366
        %v383 = vpack.c.b16 %v369, %v368
        %v384 = vpack.c.b16 %v371, %v370
        %v385 = vpack.c.b16 %v373, %v372
        %v386 = vpack.c.b16 %v375, %v374
        %v387 = vpack.c.b16 %v377, %v376
        %v388 = vpack.c.b16 %v379, %v378
        %v389 = vpack.c.b16 %v381, %v380
        %398 = vmatprep.subr.bf16.mxu0 0
        %399 = vmatpush1.bf16.msra.mxu0 %v382
        %400 = vmatprep.subr.bf16.mxu0 0
        %401 = vmatpush1.bf16.msra.mxu0 %v383
        %402 = vmatprep.subr.bf16.mxu0 0
        %403 = vmatpush1.bf16.msra.mxu0 %v384
        %404 = vmatprep.subr.bf16.mxu0 0
        %405 = vmatpush1.bf16.msra.mxu0 %v385
        %406 = vmatprep.subr.bf16.mxu0 0
        %407 = vmatpush1.bf16.msra.mxu0 %v386
        %408 = vmatprep.subr.bf16.mxu0 0
        %409 = vmatpush1.bf16.msra.mxu0 %v387
        %410 = vmatprep.subr.bf16.mxu0 0
        %411 = vmatpush1.bf16.msra.mxu0 %v388
        %412 = vmatprep.subr.bf16.mxu0 0
        %413 = vmatpush1.bf16.msra.mxu0 %v389
        %414 = vmatprep.subr.bf16.mxu0 0
        %415 = vmatpush1.bf16.msra.mxu0 0
        %416 = vmatprep.subr.bf16.mxu0 0
        %417 = vmatpush1.bf16.msra.mxu0 0
        %418 = vmatprep.subr.bf16.mxu0 0
        %419 = vmatpush1.bf16.msra.mxu0 0
        %420 = vmatprep.subr.bf16.mxu0 0
        %421 = vmatpush1.bf16.msra.mxu0 0
        %422 = vmatprep.subr.bf16.mxu0 0
        %423 = vmatpush1.bf16.msra.mxu0 0
        %424 = vmatprep.subr.bf16.mxu0 0
        %425 = vmatpush1.bf16.msra.mxu0 0
        %426 = vmatprep.subr.bf16.mxu0 0
        %427 = vmatpush1.bf16.msra.mxu0 0
        %428 = vmatprep.subr.bf16.mxu0 0
        %429 = vmatpush1.bf16.msra.mxu0 0
        %430 = vmatprep.mubr.bf16.mxu0 0
        %431 = vmatmul.mubr.bf16.gmra.mrb[0].mxu0 %v322
        %v432 = vpop.f32.mrb[0].mxu0
        %v433 = vadd.f32 %v348, %v432
        %v434 = vpop.f32.mrb[0].mxu0
        %v435 = vpop.f32.mrb[0].mxu0
        %v436 = vadd.f32 %v348, %v435
        %v437 = vpop.f32.mrb[0].mxu0
        %438 = vmatprep.mubr.bf16.mxu0 0
        %439 = vmatmul.mubr.bf16.gmra.mrb[0].mxu0 %v325
        %v440 = vpop.f32.mrb[0].mxu0
        %v441 = vadd.f32 %v348, %v440
        %v442 = vpop.f32.mrb[0].mxu0
        %v443 = vpop.f32.mrb[0].mxu0
        %v444 = vadd.f32 %v348, %v443
        %v445 = vpop.f32.mrb[0].mxu0
        %446 = vdwg.mxu0
        %vm447 = vcmp.gt.f32.partialorder %v433, 0.0
        %vm448 = vcmp.gt.f32.partialorder %v436, 0.0
        %vm449 = vcmp.gt.f32.partialorder %v441, 0.0
        %vm450 = vcmp.gt.f32.partialorder %v444, 0.0
        %v451 = vmul.f32 %v433, 1.442695
        %v452 = vpow.pop %v451
        %v453 = vmul.f32 %v436, 1.442695
        %v454 = vpow.pop %v453
        %v455 = vmul.f32 %v441, 1.442695
        %v456 = vpow.pop %v455
        %v457 = vmul.f32 %v444, 1.442695
        %v458 = vpow.pop %v457
        %v459 = vsub.f32 %v452, 1.0
        %v460 = vsub.f32 %v454, 1.0
        %v461 = vsub.f32 %v456, 1.0
        %v462 = vsub.f32 %v458, 1.0
        %v463 = vmul.f32 %v459, 1.6732632
        %v464 = vmul.f32 %v460, 1.6732632
        %v465 = vmul.f32 %v461, 1.6732632
        %v466 = vmul.f32 %v462, 1.6732632
        %v467 = vsel %vm447, %v433, %v463
        %v468 = vsel %vm448, %v436, %v464
        %v469 = vsel %vm449, %v441, %v465
        %v470 = vsel %vm450, %v444, %v466
        %v471 = vmul.f32 %v467, 1.050701
        %v472 = vmul.f32 %v468, 1.050701
        %v473 = vmul.f32 %v469, 1.050701
        %v474 = vmul.f32 %v470, 1.050701
        %v475 = vpack.c.bf16 %v472, %v471
        %v476 = vpack.c.bf16 %v474, %v473
        %v478 = vshrl.u32 %v475, 16
        %v480 = vshll.u32 %v475, 16
        %v482 = vrot.slane %v480, 1
        %v483 = vor.u32 %v478, %v482
        %v485 = vshll.u32 %v476, 16
        %v487 = vrot.slane %v485, 1
        %v488 = vsel %vm289, %v483, %v487
        %v489 = vshrl.u32 %v476, 16
        %v491 = vor.u32 %v489, %v487
        %v495 = vsel %vm313, %v491, %v482
        %v496 = vld [vmem:[#allocation7] sm:$0xf]
        %v497 = vld [vmem:[#allocation7 + $0x4] sm:$0xf]
        %v498 = vld [vmem:[#allocation7 + $0x8] sm:$0xf]
        %v499 = vld [vmem:[#allocation7 + $0xc] sm:$0xf]
        %v500 = vld [vmem:[#allocation7 + $0x10] sm:$0xf]
        %v501 = vld [vmem:[#allocation7 + $0x14] sm:$0xf]
        %v502 = vld [vmem:[#allocation7 + $0x18] sm:$0xf]
        %v503 = vld [vmem:[#allocation7 + $0x1c] sm:$0xf]
        %v504 = vld [vmem:[#allocation7 + $0x20] sm:$0xf]
        %v505 = vld [vmem:[#allocation7 + $0x24] sm:$0xf]
        %v506 = vld [vmem:[#allocation7 + $0x28] sm:$0xf]
        %v507 = vld [vmem:[#allocation7 + $0x2c] sm:$0xf]
        %v508 = vld [vmem:[#allocation7 + $0x30] sm:$0xf]
        %v509 = vld [vmem:[#allocation7 + $0x34] sm:$0xf]
        %v510 = vld [vmem:[#allocation7 + $0x38] sm:$0xf]
        %v511 = vld [vmem:[#allocation7 + $0x3c] sm:$0xf]
        %v512 = vld [vmem:[#allocation7 + $0x40] sm:$0xf]
        %v513 = vld [vmem:[#allocation7 + $0x44] sm:$0xf]
        %v514 = vld [vmem:[#allocation7 + $0x48] sm:$0xf]
        %v515 = vld [vmem:[#allocation7 + $0x4c] sm:$0xf]
        %v516 = vld [vmem:[#allocation7 + $0x50] sm:$0xf]
        %v517 = vld [vmem:[#allocation7 + $0x54] sm:$0xf]
        %v518 = vld [vmem:[#allocation7 + $0x58] sm:$0xf]
        %v519 = vld [vmem:[#allocation7 + $0x5c] sm:$0xf]
        %v520 = vld [vmem:[#allocation7 + $0x60] sm:$0xf]
        %v521 = vld [vmem:[#allocation7 + $0x64] sm:$0xf]
        %v522 = vld [vmem:[#allocation7 + $0x68] sm:$0xf]
        %v523 = vld [vmem:[#allocation7 + $0x6c] sm:$0xf]
        %v524 = vld [vmem:[#allocation7 + $0x70] sm:$0xf]
        %v525 = vld [vmem:[#allocation7 + $0x74] sm:$0xf]
        %v526 = vld [vmem:[#allocation7 + $0x78] sm:$0xf]
        %v527 = vld [vmem:[#allocation7 + $0x7c] sm:$0xf]
        %v528 = vld [vmem:[#allocation7 + $0x80] sm:$0xf]
        %v529 = vld [vmem:[#allocation7 + $0x84] sm:$0xf]
        %v530 = vld [vmem:[#allocation7 + $0x88] sm:$0xf]
        %v531 = vld [vmem:[#allocation7 + $0x8c] sm:$0xf]
        %v532 = vld [vmem:[#allocation7 + $0x90] sm:$0xf]
        %v533 = vld [vmem:[#allocation7 + $0x94] sm:$0xf]
        %v534 = vld [vmem:[#allocation7 + $0x98] sm:$0xf]
        %v535 = vld [vmem:[#allocation7 + $0x9c] sm:$0xf]
        %v536 = vld [vmem:[%s4] sm:$0x1]
        %v538 = vlaneseq
        %v539 = vshrl.u32 %v538, 7
        %v540 = vsub.s32 0, %v539
        %v541 = vrot.slane %v536, %v540
        %v583 = vunpack.c.l.b16 %v496
        %v584 = vunpack.c.l.b16 %v497
        %v585 = vunpack.c.l.b16 %v498
        %v586 = vunpack.c.l.b16 %v499
        %v587 = vunpack.c.l.b16 %v500
        %v588 = vunpack.c.l.b16 %v501
        %v589 = vunpack.c.l.b16 %v502
        %v590 = vunpack.c.l.b16 %v503
        %v591 = vunpack.c.l.b16 %v504
        %v592 = vunpack.c.l.b16 %v505
        %v593 = vunpack.c.l.b16 %v506
        %v594 = vunpack.c.l.b16 %v507
        %v595 = vunpack.c.l.b16 %v508
        %v596 = vunpack.c.l.b16 %v509
        %v597 = vunpack.c.l.b16 %v510
        %v598 = vunpack.c.l.b16 %v511
        %v599 = vunpack.c.l.b16 %v512
        %v600 = vunpack.c.l.b16 %v513
        %v601 = vunpack.c.l.b16 %v514
        %v602 = vunpack.c.l.b16 %v515
        %v603 = vunpack.c.l.b16 %v516
        %v604 = vunpack.c.l.b16 %v517
        %v605 = vunpack.c.l.b16 %v518
        %v606 = vunpack.c.l.b16 %v519
        %v607 = vunpack.c.l.b16 %v520
        %v608 = vunpack.c.l.b16 %v521
        %v609 = vunpack.c.l.b16 %v522
        %v610 = vunpack.c.l.b16 %v523
        %v611 = vunpack.c.l.b16 %v524
        %v612 = vunpack.c.l.b16 %v525
        %v613 = vunpack.c.l.b16 %v526
        %v614 = vunpack.c.l.b16 %v527
        %v615 = vunpack.c.l.b16 %v528
        %v616 = vunpack.c.l.b16 %v529
        %v617 = vunpack.c.l.b16 %v530
        %v618 = vunpack.c.l.b16 %v531
        %v619 = vunpack.c.l.b16 %v532
        %v620 = vunpack.c.l.b16 %v533
        %v621 = vunpack.c.l.b16 %v534
        %v622 = vunpack.c.l.b16 %v535
        %v623 = vpack.c.b16 %v584, %v583
        %v624 = vpack.c.b16 %v586, %v585
        %v625 = vpack.c.b16 %v588, %v587
        %v626 = vpack.c.b16 %v590, %v589
        %v627 = vpack.c.b16 %v592, %v591
        %v628 = vpack.c.b16 %v594, %v593
        %v629 = vpack.c.b16 %v596, %v595
        %v630 = vpack.c.b16 %v598, %v597
        %v631 = vpack.c.b16 %v600, %v599
        %v632 = vpack.c.b16 %v602, %v601
        %v633 = vpack.c.b16 %v604, %v603
        %v634 = vpack.c.b16 %v606, %v605
        %v635 = vpack.c.b16 %v608, %v607
        %v636 = vpack.c.b16 %v610, %v609
        %v637 = vpack.c.b16 %v612, %v611
        %v638 = vpack.c.b16 %v614, %v613
        %v639 = vpack.c.b16 %v616, %v615
        %v640 = vpack.c.b16 %v618, %v617
        %v641 = vpack.c.b16 %v620, %v619
        %v642 = vpack.c.b16 %v622, %v621
        %v664 = vsel %vm320, %v301, 0
        %v667 = vsel %vm320, %v314, 0
        %669 = vmatprep.subr.bf16.mxu0 0
        %670 = vmatpush1.bf16.msra.mxu0 %v623
        %671 = vmatprep.subr.bf16.mxu0 0
        %672 = vmatpush1.bf16.msra.mxu0 %v624
        %673 = vmatprep.subr.bf16.mxu0 0
        %674 = vmatpush1.bf16.msra.mxu0 %v625
        %675 = vmatprep.subr.bf16.mxu0 0
        %676 = vmatpush1.bf16.msra.mxu0 %v626
        %677 = vmatprep.subr.bf16.mxu0 0
        %678 = vmatpush1.bf16.msra.mxu0 %v627
        %679 = vmatprep.subr.bf16.mxu0 0
        %680 = vmatpush1.bf16.msra.mxu0 %v628
        %681 = vmatprep.subr.bf16.mxu0 0
        %682 = vmatpush1.bf16.msra.mxu0 %v629
        %683 = vmatprep.subr.bf16.mxu0 0
        %684 = vmatpush1.bf16.msra.mxu0 %v630
        %685 = vmatprep.subr.bf16.mxu0 0
        %686 = vmatpush1.bf16.msra.mxu0 %v631
        %687 = vmatprep.subr.bf16.mxu0 0
        %688 = vmatpush1.bf16.msra.mxu0 %v632
        %689 = vmatprep.subr.bf16.mxu0 0
        %690 = vmatpush1.bf16.msra.mxu0 %v633
        %691 = vmatprep.subr.bf16.mxu0 0
        %692 = vmatpush1.bf16.msra.mxu0 %v634
        %693 = vmatprep.subr.bf16.mxu0 0
        %694 = vmatpush1.bf16.msra.mxu0 %v635
        %695 = vmatprep.subr.bf16.mxu0 0
        %696 = vmatpush1.bf16.msra.mxu0 %v636
        %697 = vmatprep.subr.bf16.mxu0 0
        %698 = vmatpush1.bf16.msra.mxu0 %v637
        %699 = vmatprep.subr.bf16.mxu0 0
        %700 = vmatpush1.bf16.msra.mxu0 %v638
        %701 = vmatprep.mubr.bf16.mxu0 %v488
        %702 = vmatmul.mubr.bf16.gmra.mrb[0].mxu0 %v475
        %v703 = vpop.f32.mrb[0].mxu0
        %v704 = vadd.f32 %v541, %v703
        %v705 = vpop.f32.mrb[0].mxu0
        %v706 = vpop.f32.mrb[0].mxu0
        %v707 = vadd.f32 %v541, %v706
        %v708 = vpop.f32.mrb[0].mxu0
        %709 = vmatprep.mubr.bf16.mxu0 %v495
        %710 = vmatmul.mubr.bf16.gmra.mrb[0].mxu0 %v476
        %v711 = vpop.f32.mrb[0].mxu0
        %v712 = vadd.f32 %v541, %v711
        %v713 = vpop.f32.mrb[0].mxu0
        %v714 = vpop.f32.mrb[0].mxu0
        %v715 = vadd.f32 %v541, %v714
        %v716 = vpop.f32.mrb[0].mxu0
        %717 = vdwg.mxu0
        %718 = vmatprep.subr.bf16.mxu0 0
        %719 = vmatpush1.bf16.msra.mxu0 %v639
        %720 = vmatprep.subr.bf16.mxu0 0
        %721 = vmatpush1.bf16.msra.mxu0 %v640
        %722 = vmatprep.subr.bf16.mxu0 0
        %723 = vmatpush1.bf16.msra.mxu0 %v641
        %724 = vmatprep.subr.bf16.mxu0 0
        %725 = vmatpush1.bf16.msra.mxu0 %v642
        %726 = vmatprep.subr.bf16.mxu0 0
        %727 = vmatpush1.bf16.msra.mxu0 0
        %728 = vmatprep.subr.bf16.mxu0 0
        %729 = vmatpush1.bf16.msra.mxu0 0
        %730 = vmatprep.subr.bf16.mxu0 0
        %731 = vmatpush1.bf16.msra.mxu0 0
        %732 = vmatprep.subr.bf16.mxu0 0
        %733 = vmatpush1.bf16.msra.mxu0 0
        %734 = vmatprep.subr.bf16.mxu0 0
        %735 = vmatpush1.bf16.msra.mxu0 0
        %736 = vmatprep.subr.bf16.mxu0 0
        %737 = vmatpush1.bf16.msra.mxu0 0
        %738 = vmatprep.subr.bf16.mxu0 0
        %739 = vmatpush1.bf16.msra.mxu0 0
        %740 = vmatprep.subr.bf16.mxu0 0
        %741 = vmatpush1.bf16.msra.mxu0 0
        %742 = vmatprep.subr.bf16.mxu0 0
        %743 = vmatpush1.bf16.msra.mxu0 0
        %744 = vmatprep.subr.bf16.mxu0 0
        %745 = vmatpush1.bf16.msra.mxu0 0
        %746 = vmatprep.subr.bf16.mxu0 0
        %747 = vmatpush1.bf16.msra.mxu0 0
        %748 = vmatprep.subr.bf16.mxu0 0
        %749 = vmatpush1.bf16.msra.mxu0 0
        %750 = vmatprep.mubr.bf16.mxu0 0
        %751 = vmatmul.mubr.bf16.gmra.mrb[0].mxu0 %v664
        %v752 = vpop.f32.mrb[0].mxu0
        %v753 = vadd.f32 %v704, %v752
        %v754 = vpop.f32.mrb[0].mxu0
        %v755 = vpop.f32.mrb[0].mxu0
        %v756 = vadd.f32 %v707, %v755
        %v757 = vpop.f32.mrb[0].mxu0
        %758 = vmatprep.mubr.bf16.mxu0 0
        %759 = vmatmul.mubr.bf16.gmra.mrb[0].mxu0 %v667
        %v760 = vpop.f32.mrb[0].mxu0
        %v761 = vadd.f32 %v712, %v760
        %v762 = vpop.f32.mrb[0].mxu0
        %v763 = vpop.f32.mrb[0].mxu0
        %v764 = vadd.f32 %v715, %v763
        %v765 = vpop.f32.mrb[0].mxu0
        %766 = vdwg.mxu0
        %767 = vrot.lane.b32.xlu0 %v753, 8
        %v768 = vpop.permute.xlu0 %767
        %769 = vrot.lane.b32.xlu0 %v756, 8
        %v770 = vpop.permute.xlu0 %769
        %771 = vrot.lane.b32.xlu0 %v761, 8
        %v772 = vpop.permute.xlu0 %771
        %773 = vrot.lane.b32.xlu0 %v764, 8
        %v774 = vpop.permute.xlu0 %773
        %775 = vrot.lane.b32.xlu0 %v753, 120
        %v776 = vpop.permute.xlu0 %775
        %777 = vrot.lane.b32.xlu0 %v756, 120
        %v778 = vpop.permute.xlu0 %777
        %779 = vrot.lane.b32.xlu0 %v761, 120
        %v780 = vpop.permute.xlu0 %779
        %781 = vrot.lane.b32.xlu0 %v764, 120
        %v782 = vpop.permute.xlu0 %781
        %v783 = vmax.f32 %v753, %v768
        %v784 = vmax.f32 %v756, %v770
        %v785 = vmax.f32 %v761, %v772
        %v786 = vmax.f32 %v764, %v774
        %v787 = vmax.f32 %v783, %v776
        %v788 = vmax.f32 %v784, %v778
        %v789 = vmax.f32 %v785, %v780
        %v790 = vmax.f32 %v786, %v782
        %v791 = vpack.c.bf16 %v788, %v787
        %v792 = vpack.c.bf16 %v790, %v789
        %v795 = vunpack.c.l.b16 %v791
        %v796 = vunpack.c.h.b16 %v791
        %v797 = vunpack.c.l.b16 %v792
        %v798 = vunpack.c.h.b16 %v792
        %v799 = vpack.c.b16 %v795, %v795
        %v800 = vpack.c.b16 %v796, %v796
        %v801 = vpack.c.b16 %v797, %v797
        %v802 = vpack.c.b16 %v798, %v798
        %807 = vst [vmem:[%s271] sm:$0xf] %v799
        %808 = vst [vmem:[%s271 + $0x4] sm:$0xf] %v800
        %809 = vst [vmem:[%s271 + $0x8] sm:$0xf] %v801
        %810 = vst [vmem:[%s271 + $0xc] sm:$0xf] %v802
        %s811 = sand.u32 %s141, 1
        %s812 = scalar_lea.sflag [#allocation4], %s811
        %s813 = sand.u32 %s141, 1
        %s814 = smul.addr %s813, 16
        %s815 = scalar_lea.vmem [#allocation8], %s814
        // Predicated region
        $region53: #{tpu_custom_call.1} parent=39 // pred_check
          %p816 = pneg %p151
        $region54: #{tpu_custom_call.1} parent=39 // pred_check_branch
          %818 = sbr.rel (%p816) target = $region56
        $region55: #{tpu_custom_call.1} parent=39 // pred_region
          %s819 = smul.u32 4, %s23
          %s821 = ssub.s32 256, 256
          %822 = vsyncadd %s812, %s821
          %s823 = smul.addr %s819, 64
          %s824 = scalar_lea.hbm %s5, %s823
          %s825 = sshll.u32 %s815, 4
          %s826 = int_to_ptr.vmem [resolvable:$true] %s825
          %831 = dma.vmem_to_hbm [thread:$0]  %s826, 256, %s824, %s812, 64, 64, 4
        $region56: #{tpu_custom_call.1} parent=39 // pred_fallthru
          _
      $region40: #{tpu_custom_call.1} parent=5 // pred_fallthru
        _
      %p832 = scmp.le.s32.totalorder 2, %s18
      // Predicated region
      $region57: #{tpu_custom_call.1} parent=5 // pred_check
        %p833 = pneg %p832
      $region58: #{tpu_custom_call.1} parent=5 // pred_check_branch
        %835 = sbr.rel (%p833) target = $region60
      $region59: #{tpu_custom_call.1} parent=5 // pred_region
        %s836 = ssub.s32 %s18, 2
        // Predicated region
        $region61: #{tpu_custom_call.1} parent=59 // pred_check
          %p837 = pneg %p157
        $region62: #{tpu_custom_call.1} parent=59 // pred_check_branch
          %839 = sbr.rel (%p837) target = $region64
        $region63: #{tpu_custom_call.1} parent=59 // pred_region
          %s840 = sand.u32 %s142, 1
          %s841 = scalar_lea.sflag [#allocation4], %s840
          %s842 = sand.u32 %s142, 1
          %s843 = smul.addr %s842, 16
          %s844 = scalar_lea.vmem [#allocation8], %s843
          %845 = dma.done %s841, 256
        $region64: #{tpu_custom_call.1} parent=59 // pred_fallthru
          _
      $region60: #{tpu_custom_call.1} parent=5 // pred_fallthru
        _
    $region6: #{tpu_custom_call.1} parent=1 // loop_footer
      %s22 = sadd.s32 1, %s18
    $region7: #{tpu_custom_call.1} parent=1 // loop_footer_branch
      %17 = sbr.rel target = $region3
    $region8: #{tpu_custom_call.1} parent=1 // loop_exit
      _
    %846 = vsyncpa [#allocation3], 1
    %s847 = scalar_lea.sflag [#allocation3], 1
    %848 = vsyncpa %s847, 1
    %849 = vsyncpa [#allocation6], 1
    %850 = vsyncpa [#allocation4], 1
    %s851 = scalar_lea.sflag [#allocation4], 1
    %852 = vsyncpa %s851, 1

</llo_original>
